<compile_context>
chip_gen: v5e
topology: v5e:2x2
jax: 0.10.0
libtpu: 0.0.40
codegen_flags: <defaults>
</compile_context>

<pallas_src>
import numpy as np
import jax
import jax.numpy as jnp
from jax.experimental import pallas as pl
from jax.experimental.pallas import tpu as pltpu


# ----------------------------------------------------------------------------
# helpers
# ----------------------------------------------------------------------------
_VMEM_LIMIT = 48 * 1024 * 1024   # safe on v5e/v6e (128 MiB) and v7x (64 MiB/TC)


def _cparams(*sems):
    return pltpu.CompilerParams(dimension_semantics=tuple(sems),
                                vmem_limit_bytes=_VMEM_LIMIT)


def _round_up(x, m):
    return ((x + m - 1) // m) * m


def _pad_rows(x, mp):
    m = x.shape[0]
    return x if mp == m else jnp.pad(x, ((0, mp - m), (0, 0)))


# ----------------------------------------------------------------------------
# generic row-tiled pallas_call: grid over B*L row tiles ("parallel"),
# constant-index BlockSpecs for weights (VMEM-resident across the grid).
# ----------------------------------------------------------------------------
def _row_tiled_call(kernel, row_args, const_args, n_out):
    m = row_args[0].shape[0]
    tm = 256 if m >= 256 else _round_up(m, 8)
    mp = _round_up(m, tm)
    row_args = [_pad_rows(a, mp) for a in row_args]

    in_specs = ([pl.BlockSpec((tm, a.shape[1]), lambda i: (i, 0)) for a in row_args]
                + [pl.BlockSpec(tuple(w.shape), lambda i: (0, 0)) for w in const_args])

    out = pl.pallas_call(
        kernel,
        grid=(mp // tm,),
        in_specs=in_specs,
        out_specs=pl.BlockSpec((tm, n_out), lambda i: (i, 0)),
        out_shape=jax.ShapeDtypeStruct((mp, n_out), jnp.float32),
        compiler_params=_cparams("parallel"),
    )(*row_args, *const_args)
    return out[:m]


# ----------------------------------------------------------------------------
# Kernel 1: per-(batch, head) scaled-dot-product attention core.
#   q is pre-scaled by 1/sqrt(d_k) (folded into the Q weights at init time).
# ----------------------------------------------------------------------------
def _attn_core_kernel(x_ref, bias_ref, wq_ref, bq_ref, wk_ref, bk_ref,
                      wv_ref, bv_ref, ctx_ref, attn_ref):
    x = x_ref[0].astype(jnp.bfloat16)                                   # [L, D]
    q = jnp.dot(x, wq_ref[0], preferred_element_type=jnp.float32) + bq_ref[0]
    k = jnp.dot(x, wk_ref[0], preferred_element_type=jnp.float32) + bk_ref[0]
    v = jnp.dot(x, wv_ref[0], preferred_element_type=jnp.float32) + bv_ref[0]

    # scores [Lq, Lk]: contract last dims (q @ k^T) on the MXU, bf16 in / f32 acc
    s = jax.lax.dot_general(q.astype(jnp.bfloat16), k.astype(jnp.bfloat16),
                            (((1,), (1,)), ((), ())),
                            preferred_element_type=jnp.float32)
    s = s + bias_ref[0]                     # additive -1e30 bias on masked keys

    m = jnp.max(s, axis=-1, keepdims=True)
    p = jnp.exp(s - m)
    denom = jnp.sum(p, axis=-1, keepdims=True)                  # >= 1, never 0
    attn = p * pl.reciprocal(denom, approx=True)                # softmax probs
    ctx = jnp.dot(attn.astype(jnp.bfloat16), v.astype(jnp.bfloat16),
                  preferred_element_type=jnp.float32)                   # [L, dv]
    ctx_ref[0, 0] = ctx
    attn_ref[0, 0] = attn


def attn_core(x, attn_bias, p, n_head, d_k, d_v):
    B, L, D = x.shape
    return pl.pallas_call(
        _attn_core_kernel,
        grid=(B, n_head),
        in_specs=[
            pl.BlockSpec((1, L, D),   lambda b, h: (b, 0, 0)),
            pl.BlockSpec((1, L, L),   lambda b, h: (b, 0, 0)),
            pl.BlockSpec((1, D, d_k), lambda b, h: (h, 0, 0)),
            pl.BlockSpec((1, 1, d_k), lambda b, h: (h, 0, 0)),
            pl.BlockSpec((1, D, d_k), lambda b, h: (h, 0, 0)),
            pl.BlockSpec((1, 1, d_k), lambda b, h: (h, 0, 0)),
            pl.BlockSpec((1, D, d_v), lambda b, h: (h, 0, 0)),
            pl.BlockSpec((1, 1, d_v), lambda b, h: (h, 0, 0)),
        ],
        out_specs=[
            pl.BlockSpec((1, 1, L, d_v), lambda b, h: (b, h, 0, 0)),
            pl.BlockSpec((1, 1, L, L),   lambda b, h: (b, h, 0, 0)),
        ],
        out_shape=(jax.ShapeDtypeStruct((B, n_head, L, d_v), jnp.float32),
                   jax.ShapeDtypeStruct((B, n_head, L, L), jnp.float32)),
        compiler_params=_cparams("parallel", "parallel"),
    )(x, attn_bias, p['wq_h'], p['bq_h'], p['wk_h'], p['bk_h'],
      p['wv_h'], p['bv_h'])


# ----------------------------------------------------------------------------
# Kernel 2: attention output projection + residual + LayerNorm + non-pad mask
# ----------------------------------------------------------------------------
def _attn_out_kernel(ctx_ref, res_ref, npad_ref, wo_ref, bo_ref, g_ref, b_ref, o_ref):
    ctx = ctx_ref[...].astype(jnp.bfloat16)
    o = jnp.dot(ctx, wo_ref[...], preferred_element_type=jnp.float32) + bo_ref[...]
    o = o + res_ref[...]
    mu = jnp.mean(o, axis=-1, keepdims=True)
    var = jnp.mean((o - mu) ** 2, axis=-1, keepdims=True)
    o = (o - mu) * jax.lax.rsqrt(var + 1e-5) * g_ref[...] + b_ref[...]
    o_ref[...] = o * npad_ref[...]


def attn_out(ctx2, res2, npad2, p):
    return _row_tiled_call(_attn_out_kernel, [ctx2, res2, npad2],
                           [p['wo'], p['bo'], p['ln1_g'], p['ln1_b']],
                           p['bo'].shape[1])


# ----------------------------------------------------------------------------
# Kernel 3: position-wise FFN + residual + LayerNorm + non-pad mask
# ----------------------------------------------------------------------------
def _ffn_kernel(x_ref, npad_ref, w1_ref, b1_ref, w2_ref, b2_ref, g_ref, be_ref, o_ref):
    x = x_ref[...]
    h = jnp.dot(x.astype(jnp.bfloat16), w1_ref[...],
                preferred_element_type=jnp.float32) + b1_ref[...]
    h = jnp.maximum(h, 0.0)
    f = jnp.dot(h.astype(jnp.bfloat16), w2_ref[...],
                preferred_element_type=jnp.float32) + b2_ref[...]
    f = f + x
    mu = jnp.mean(f, axis=-1, keepdims=True)
    var = jnp.mean((f - mu) ** 2, axis=-1, keepdims=True)
    f = (f - mu) * jax.lax.rsqrt(var + 1e-5) * g_ref[...] + be_ref[...]
    o_ref[...] = f * npad_ref[...]


def ffn(h2, npad2, p):
    return _row_tiled_call(_ffn_kernel, [h2, npad2],
                           [p['w1'], p['b1'], p['w2'], p['b2'],
                            p['ln2_g'], p['ln2_b']],
                           p['b2'].shape[1])


# ----------------------------------------------------------------------------
# parameters & full forward of one TransformerEncoderLayer
# ----------------------------------------------------------------------------
def init_params(cfg, key):
    d_model, d_inner = cfg['d_model'], cfg['d_inner']
    n_head, d_k, d_v = cfg['n_head'], cfg['d_k'], cfg['d_v']
    temperature = float(np.sqrt(d_k))
    ks = iter(jax.random.split(key, 8))

    def nrm(shape, std):
        return (std * jax.random.normal(next(ks), shape)).astype(jnp.float32)

    def heads_w(w, dh):      # [D, H*dh] -> [H, D, dh]
        return jnp.transpose(w.reshape(d_model, n_head, dh), (1, 0, 2)).astype(jnp.bfloat16)

    def heads_b(dh):         # zero Linear biases, shape [H, 1, dh]
        return jnp.zeros((n_head, 1, dh), jnp.float32)

    # fold the 1/sqrt(d_k) softmax temperature into the Q projection
    wq = nrm((d_model, n_head * d_k), np.sqrt(2.0 / (d_model + d_k))) / temperature
    wk = nrm((d_model, n_head * d_k), np.sqrt(2.0 / (d_model + d_k)))
    wv = nrm((d_model, n_head * d_v), np.sqrt(2.0 / (d_model + d_v)))

    return {
        'wq_h': heads_w(wq, d_k), 'bq_h': heads_b(d_k),
        'wk_h': heads_w(wk, d_k), 'bk_h': heads_b(d_k),
        'wv_h': heads_w(wv, d_v), 'bv_h': heads_b(d_v),
        'wo': nrm((n_head * d_v, d_model),
                  np.sqrt(2.0 / (n_head * d_v + d_model))).astype(jnp.bfloat16),
        'bo': jnp.zeros((1, d_model), jnp.float32),
        'ln1_g': jnp.ones((1, d_model), jnp.float32),
        'ln1_b': jnp.zeros((1, d_model), jnp.float32),
        'w1': nrm((d_model, d_inner),
                  np.sqrt(2.0 / (d_model + d_inner))).astype(jnp.bfloat16),
        'b1': jnp.zeros((1, d_inner), jnp.float32),
        'w2': nrm((d_inner, d_model),
                  np.sqrt(2.0 / (d_inner + d_model))).astype(jnp.bfloat16),
        'b2': jnp.zeros((1, d_model), jnp.float32),
        'ln2_g': jnp.ones((1, d_model), jnp.float32),
        'ln2_b': jnp.zeros((1, d_model), jnp.float32),
    }


def transformer_encoder_layer(enc_input, non_pad_mask, slf_attn_mask, params, cfg):
    """Mirrors TransformerEncoderLayer.forward (eval mode).

    enc_input:     [B, L, d_model] f32
    non_pad_mask:  [B, L, 1] f32 (1.0 on real tokens, 0.0 on pads)
    slf_attn_mask: [B, L, L] bool (True where the key position is masked)
    Returns (enc_output [B, L, d_model], enc_slf_attn [n_head*B, L, L]).
    """
    B, L, d_model = enc_input.shape
    n_head, d_k, d_v = cfg['n_head'], cfg['d_k'], cfg['d_v']
    M = B * L

    # boolean mask -> additive bias (finite, avoids inf-inf NaNs)  [glue, O(B*L*L)]
    attn_bias = jnp.where(slf_attn_mask, jnp.float32(-1e30), jnp.float32(0.0))
    npad2 = non_pad_mask.reshape(M, 1).astype(jnp.float32)

    # multi-head self-attention core
    ctx, attn = attn_core(enc_input, attn_bias, params, n_head, d_k, d_v)
    ctx2 = jnp.transpose(ctx, (0, 2, 1, 3)).reshape(M, n_head * d_v)

    # fc + residual + LayerNorm, then *= non_pad_mask
    h2 = attn_out(ctx2, enc_input.reshape(M, d_model), npad2, params)

    # position-wise FFN + residual + LayerNorm, then *= non_pad_mask
    o2 = ffn(h2, npad2, params)

    enc_output = o2.reshape(B, L, d_model)
    # match PyTorch attn layout: [n_head * B, L, L] (head-major)
    enc_slf_attn = jnp.transpose(attn, (1, 0, 2, 3)).reshape(n_head * B, L, L)
    return enc_output, enc_slf_attn


# ----------------------------------------------------------------------------
if __name__ == "__main__":
    cfg = dict(d_model=32, d_inner=64, n_head=2, d_k=16, d_v=16)
    B, L = 2, 8

    key = jax.random.PRNGKey(0)
    k_in, k_par = jax.random.split(key)
    enc_input = jax.random.normal(k_in, (B, L, cfg['d_model']), dtype=jnp.float32)

    # batch 0: full length 8; batch 1: 5 real tokens + 3 pads
    seq_lens = jnp.asarray([8, 5], dtype=jnp.int32)
    pad = jnp.arange(L)[None, :] >= seq_lens[:, None]                    # [B, L]
    non_pad_mask = (~pad).astype(jnp.float32)[:, :, None]                # [B, L, 1]
    slf_attn_mask = jnp.broadcast_to(pad[:, None, :], (B, L, L))         # key-pad mask

    params = init_params(cfg, k_par)
    enc_out, enc_attn = transformer_encoder_layer(enc_input, non_pad_mask,
                                                  slf_attn_mask, params, cfg)
    enc_out = jax.block_until_ready(enc_out)
    enc_attn = jax.block_until_ready(enc_attn)

    assert enc_out.shape == (B, L, cfg['d_model'])
    assert enc_attn.shape == (cfg['n_head'] * B, L, L)
    assert bool(jnp.all(jnp.isfinite(enc_out)))
    assert bool(jnp.all(jnp.isfinite(enc_attn)))
    print("KERNEL_OK")
</pallas_src>

<mosaic_0001>
module attributes {stable_mosaic.version = 11 : i64} {
  func.func @_attn_core_kernel(%arg0: i32, %arg1: i32, %arg2: memref<1x8x32xf32, #tpu.memory_space<vmem>>, %arg3: memref<1x8x8xf32, #tpu.memory_space<vmem>>, %arg4: memref<1x32x16xbf16, #tpu.memory_space<vmem>>, %arg5: memref<1x1x16xf32, #tpu.memory_space<vmem>>, %arg6: memref<1x32x16xbf16, #tpu.memory_space<vmem>>, %arg7: memref<1x1x16xf32, #tpu.memory_space<vmem>>, %arg8: memref<1x32x16xbf16, #tpu.memory_space<vmem>>, %arg9: memref<1x1x16xf32, #tpu.memory_space<vmem>>, %arg10: memref<1x1x8x16xf32, #tpu.memory_space<vmem>>, %arg11: memref<1x1x8x8xf32, #tpu.memory_space<vmem>>) attributes {dimension_semantics = [#tpu.dimension_semantics<parallel>, #tpu.dimension_semantics<parallel>], iteration_bounds = array<i64: 2, 2>, scalar_prefetch = 0 : i64, scratch_operands = 0 : i64, tpu.core_type = #tpu.core_type<tc>, window_params = [{transform_indices = @transform_0, window_bounds = array<i64: 1, 8, 32>}, {transform_indices = @transform_1, window_bounds = array<i64: 1, 8, 8>}, {transform_indices = @transform_2, window_bounds = array<i64: 1, 32, 16>}, {transform_indices = @transform_3, window_bounds = array<i64: 1, 1, 16>}, {transform_indices = @transform_4, window_bounds = array<i64: 1, 32, 16>}, {transform_indices = @transform_5, window_bounds = array<i64: 1, 1, 16>}, {transform_indices = @transform_6, window_bounds = array<i64: 1, 32, 16>}, {transform_indices = @transform_7, window_bounds = array<i64: 1, 1, 16>}, {transform_indices = @transform_8, window_bounds = array<i64: 1, 1, 8, 16>}, {transform_indices = @transform_9, window_bounds = array<i64: 1, 1, 8, 8>}]} {
    %c0 = arith.constant 0 : index
    %c0_0 = arith.constant 0 : index
    %c0_1 = arith.constant 0 : index
    %0 = vector.load %arg2[%c0, %c0_0, %c0_1] : memref<1x8x32xf32, #tpu.memory_space<vmem>>, vector<1x8x32xf32>
    %1 = vector.shape_cast %0 : vector<1x8x32xf32> to vector<8x32xf32>
    %2 = arith.truncf %1 : vector<8x32xf32> to vector<8x32xbf16>
    %c0_2 = arith.constant 0 : index
    %c0_3 = arith.constant 0 : index
    %c0_4 = arith.constant 0 : index
    %3 = vector.load %arg4[%c0_2, %c0_3, %c0_4] : memref<1x32x16xbf16, #tpu.memory_space<vmem>>, vector<1x32x16xbf16>
    %4 = vector.shape_cast %3 : vector<1x32x16xbf16> to vector<32x16xbf16>
    %cst = arith.constant dense<0.000000e+00> : vector<8x16xf32>
    %5 = tpu.matmul %2, %4, %cst {dimension_numbers = #tpu.dot_dimension_numbers<[1], [0], [0], [1], [0, 0, 1, 1], [], []>} : vector<8x32xbf16>, vector<32x16xbf16>, vector<8x16xf32> -> vector<8x16xf32>
    %c0_5 = arith.constant 0 : index
    %c0_6 = arith.constant 0 : index
    %c0_7 = arith.constant 0 : index
    %6 = vector.load %arg5[%c0_5, %c0_6, %c0_7] : memref<1x1x16xf32, #tpu.memory_space<vmem>>, vector<1x1x16xf32>
    %7 = vector.shape_cast %6 : vector<1x1x16xf32> to vector<1x16xf32>
    %8 = vector.broadcast %7 : vector<1x16xf32> to vector<8x16xf32>
    %9 = arith.addf %5, %8 : vector<8x16xf32>
    %c0_8 = arith.constant 0 : index
    %c0_9 = arith.constant 0 : index
    %c0_10 = arith.constant 0 : index
    %10 = vector.load %arg6[%c0_8, %c0_9, %c0_10] : memref<1x32x16xbf16, #tpu.memory_space<vmem>>, vector<1x32x16xbf16>
    %11 = vector.shape_cast %10 : vector<1x32x16xbf16> to vector<32x16xbf16>
    %cst_11 = arith.constant dense<0.000000e+00> : vector<8x16xf32>
    %12 = tpu.matmul %2, %11, %cst_11 {dimension_numbers = #tpu.dot_dimension_numbers<[1], [0], [0], [1], [0, 0, 1, 1], [], []>} : vector<8x32xbf16>, vector<32x16xbf16>, vector<8x16xf32> -> vector<8x16xf32>
    %c0_12 = arith.constant 0 : index
    %c0_13 = arith.constant 0 : index
    %c0_14 = arith.constant 0 : index
    %13 = vector.load %arg7[%c0_12, %c0_13, %c0_14] : memref<1x1x16xf32, #tpu.memory_space<vmem>>, vector<1x1x16xf32>
    %14 = vector.shape_cast %13 : vector<1x1x16xf32> to vector<1x16xf32>
    %15 = vector.broadcast %14 : vector<1x16xf32> to vector<8x16xf32>
    %16 = arith.addf %12, %15 : vector<8x16xf32>
    %c0_15 = arith.constant 0 : index
    %c0_16 = arith.constant 0 : index
    %c0_17 = arith.constant 0 : index
    %17 = vector.load %arg8[%c0_15, %c0_16, %c0_17] : memref<1x32x16xbf16, #tpu.memory_space<vmem>>, vector<1x32x16xbf16>
    %18 = vector.shape_cast %17 : vector<1x32x16xbf16> to vector<32x16xbf16>
    %cst_18 = arith.constant dense<0.000000e+00> : vector<8x16xf32>
    %19 = tpu.matmul %2, %18, %cst_18 {dimension_numbers = #tpu.dot_dimension_numbers<[1], [0], [0], [1], [0, 0, 1, 1], [], []>} : vector<8x32xbf16>, vector<32x16xbf16>, vector<8x16xf32> -> vector<8x16xf32>
    %c0_19 = arith.constant 0 : index
    %c0_20 = arith.constant 0 : index
    %c0_21 = arith.constant 0 : index
    %20 = vector.load %arg9[%c0_19, %c0_20, %c0_21] : memref<1x1x16xf32, #tpu.memory_space<vmem>>, vector<1x1x16xf32>
    %21 = vector.shape_cast %20 : vector<1x1x16xf32> to vector<1x16xf32>
    %22 = vector.broadcast %21 : vector<1x16xf32> to vector<8x16xf32>
    %23 = arith.addf %19, %22 : vector<8x16xf32>
    %24 = arith.truncf %9 : vector<8x16xf32> to vector<8x16xbf16>
    %25 = arith.truncf %16 : vector<8x16xf32> to vector<8x16xbf16>
    %cst_22 = arith.constant dense<0.000000e+00> : vector<8x8xf32>
    %26 = tpu.matmul %24, %25, %cst_22 {dimension_numbers = #tpu.dot_dimension_numbers<[1], [1], [0], [0], [0, 0, 1, 0], [], []>} : vector<8x16xbf16>, vector<8x16xbf16>, vector<8x8xf32> -> vector<8x8xf32>
    %c0_23 = arith.constant 0 : index
    %c0_24 = arith.constant 0 : index
    %c0_25 = arith.constant 0 : index
    %27 = vector.load %arg3[%c0_23, %c0_24, %c0_25] : memref<1x8x8xf32, #tpu.memory_space<vmem>>, vector<1x8x8xf32>
    %28 = vector.shape_cast %27 : vector<1x8x8xf32> to vector<8x8xf32>
    %29 = arith.addf %26, %28 : vector<8x8xf32>
    %cst_26 = arith.constant dense<0xFF800000> : vector<8xf32>
    %30 = vector.multi_reduction <maximumf>, %29, %cst_26 [1] : vector<8x8xf32> to vector<8xf32>
    %31 = vector.shape_cast %30 : vector<8xf32> to vector<8x1xf32>
    %32 = vector.broadcast %31 : vector<8x1xf32> to vector<8x8xf32>
    %33 = arith.subf %29, %32 : vector<8x8xf32>
    %34 = math.exp %33 : vector<8x8xf32>
    %cst_27 = arith.constant dense<0.000000e+00> : vector<8xf32>
    %35 = vector.multi_reduction <add>, %34, %cst_27 [1] : vector<8x8xf32> to vector<8xf32>
    %36 = vector.shape_cast %35 : vector<8xf32> to vector<8x1xf32>
    %37 = tpu.reciprocal %36 {approx = true} : vector<8x1xf32> -> vector<8x1xf32>
    %38 = vector.broadcast %37 : vector<8x1xf32> to vector<8x8xf32>
    %39 = arith.mulf %34, %38 : vector<8x8xf32>
    %40 = arith.truncf %39 : vector<8x8xf32> to vector<8x8xbf16>
    %41 = arith.truncf %23 : vector<8x16xf32> to vector<8x16xbf16>
    %cst_28 = arith.constant dense<0.000000e+00> : vector<8x16xf32>
    %42 = tpu.matmul %40, %41, %cst_28 {dimension_numbers = #tpu.dot_dimension_numbers<[1], [0], [0], [1], [0, 0, 1, 1], [], []>} : vector<8x8xbf16>, vector<8x16xbf16>, vector<8x16xf32> -> vector<8x16xf32>
    %c0_29 = arith.constant 0 : index
    %c0_30 = arith.constant 0 : index
    %c0_31 = arith.constant 0 : index
    %c0_32 = arith.constant 0 : index
    %43 = vector.load %arg10[%c0_29, %c0_30, %c0_31, %c0_32] : memref<1x1x8x16xf32, #tpu.memory_space<vmem>>, vector<1x1x8x16xf32>
    %44 = vector.shape_cast %43 : vector<1x1x8x16xf32> to vector<8x16xf32>
    %45 = vector.shape_cast %42 : vector<8x16xf32> to vector<1x1x8x16xf32>
    tpu.vector_store %arg10[%c0_29, %c0_30, %c0_31, %c0_32], %45 {strides = array<i32>} : memref<1x1x8x16xf32, #tpu.memory_space<vmem>>, vector<1x1x8x16xf32>,
    %c0_33 = arith.constant 0 : index
    %c0_34 = arith.constant 0 : index
    %c0_35 = arith.constant 0 : index
    %c0_36 = arith.constant 0 : index
    %46 = vector.load %arg11[%c0_33, %c0_34, %c0_35, %c0_36] : memref<1x1x8x8xf32, #tpu.memory_space<vmem>>, vector<1x1x8x8xf32>
    %47 = vector.shape_cast %46 : vector<1x1x8x8xf32> to vector<8x8xf32>
    %48 = vector.shape_cast %39 : vector<8x8xf32> to vector<1x1x8x8xf32>
    tpu.vector_store %arg11[%c0_33, %c0_34, %c0_35, %c0_36], %48 {strides = array<i32>} : memref<1x1x8x8xf32, #tpu.memory_space<vmem>>, vector<1x1x8x8xf32>,
    return
  }
  func.func @transform_0(%arg0: i32, %arg1: i32) -> (i32, i32, i32) {
    %c0_i32 = arith.constant 0 : i32
    %c0_i32_0 = arith.constant 0 : i32
    %c0_i32_1 = arith.constant 0 : i32
    return %arg0, %c0_i32, %c0_i32_0 : i32, i32, i32
  }
  func.func @transform_1(%arg0: i32, %arg1: i32) -> (i32, i32, i32) {
    %c0_i32 = arith.constant 0 : i32
    %c0_i32_0 = arith.constant 0 : i32
    %c0_i32_1 = arith.constant 0 : i32
    return %arg0, %c0_i32, %c0_i32_0 : i32, i32, i32
  }
  func.func @transform_2(%arg0: i32, %arg1: i32) -> (i32, i32, i32) {
    %c0_i32 = arith.constant 0 : i32
    %c0_i32_0 = arith.constant 0 : i32
    %c0_i32_1 = arith.constant 0 : i32
    return %arg1, %c0_i32, %c0_i32_0 : i32, i32, i32
  }
  func.func @transform_3(%arg0: i32, %arg1: i32) -> (i32, i32, i32) {
    %c0_i32 = arith.constant 0 : i32
    %c0_i32_0 = arith.constant 0 : i32
    %c0_i32_1 = arith.constant 0 : i32
    return %arg1, %c0_i32, %c0_i32_0 : i32, i32, i32
  }
  func.func @transform_4(%arg0: i32, %arg1: i32) -> (i32, i32, i32) {
    %c0_i32 = arith.constant 0 : i32
    %c0_i32_0 = arith.constant 0 : i32
    %c0_i32_1 = arith.constant 0 : i32
    return %arg1, %c0_i32, %c0_i32_0 : i32, i32, i32
  }
  func.func @transform_5(%arg0: i32, %arg1: i32) -> (i32, i32, i32) {
    %c0_i32 = arith.constant 0 : i32
    %c0_i32_0 = arith.constant 0 : i32
    %c0_i32_1 = arith.constant 0 : i32
    return %arg1, %c0_i32, %c0_i32_0 : i32, i32, i32
  }
  func.func @transform_6(%arg0: i32, %arg1: i32) -> (i32, i32, i32) {
    %c0_i32 = arith.constant 0 : i32
    %c0_i32_0 = arith.constant 0 : i32
    %c0_i32_1 = arith.constant 0 : i32
    return %arg1, %c0_i32, %c0_i32_0 : i32, i32, i32
  }
  func.func @transform_7(%arg0: i32, %arg1: i32) -> (i32, i32, i32) {
    %c0_i32 = arith.constant 0 : i32
    %c0_i32_0 = arith.constant 0 : i32
    %c0_i32_1 = arith.constant 0 : i32
    return %arg1, %c0_i32, %c0_i32_0 : i32, i32, i32
  }
  func.func @transform_8(%arg0: i32, %arg1: i32) -> (i32, i32, i32, i32) {
    %c0_i32 = arith.constant 0 : i32
    %c0_i32_0 = arith.constant 0 : i32
    %c0_i32_1 = arith.constant 0 : i32
    return %arg0, %arg1, %c0_i32, %c0_i32_0 : i32, i32, i32, i32
  }
  func.func @transform_9(%arg0: i32, %arg1: i32) -> (i32, i32, i32, i32) {
    %c0_i32 = arith.constant 0 : i32
    %c0_i32_0 = arith.constant 0 : i32
    %c0_i32_1 = arith.constant 0 : i32
    return %arg0, %arg1, %c0_i32, %c0_i32_0 : i32, i32, i32, i32
  }
}

</mosaic_0001>

<llo_original>
// kernel: tpu_custom_call.1
$region0: #{tpu_custom_call.1}
  #allocation0 [shape = 'u32[]', space=smem, size = 0x4, offset = 0x4, fixed_abs, tag = 'smem constant byte address 0x4 - core index']
  #allocation1 [shape = 'u32[72,128]{1,0:T(1,128)}', space=vmem, size = 0x9000, scoped, tag = 'internal scratch']
  %s0 = inlined_call_operand.vmem [shape: f32[2,8,32], index: 0, kind: input, shape index: {}]
  %s1 = inlined_call_operand.vmem [shape: f32[2,8,8], index: 1, kind: input, shape index: {}]
  %s2 = inlined_call_operand.vmem [shape: bf16[2,32,16], index: 2, kind: input, shape index: {}]
  %s3 = inlined_call_operand.vmem [shape: f32[2,1,16], index: 3, kind: input, shape index: {}]
  %s4 = inlined_call_operand.vmem [shape: bf16[2,32,16], index: 4, kind: input, shape index: {}]
  %s5 = inlined_call_operand.vmem [shape: f32[2,1,16], index: 5, kind: input, shape index: {}]
  %s6 = inlined_call_operand.vmem [shape: bf16[2,32,16], index: 6, kind: input, shape index: {}]
  %s7 = inlined_call_operand.vmem [shape: f32[2,1,16], index: 7, kind: input, shape index: {}]
  %s8 = inlined_call_operand.hbm [shape: f32[2,2,8,16], index: 8, kind: output, shape index: {0}]
  %s9 = inlined_call_operand.hbm [shape: f32[2,2,8,8], index: 9, kind: output, shape index: {1}]
  %10 = xla_tuple %s8, %s9
  %s11 = sld [smem:[#allocation0]]
  $region73: #{tpu_custom_call.1} parent=0
    _
  %s13 = ssub.s32 1, %s11
  %s14 = scalar_select 0, %s13, %s11
  $region1: #{tpu_custom_call.1} parent=0
    #allocation2 [shape = 'u8[8192]{0}', space=vmem, size = 0x2000, scoped, tag = 'output window, operand 0']
    #allocation3 [shape = 's32[2]{0}', space=sflag, size = 0x8, scoped, tag = 'scoped memory for tpu_custom_call.1']
    #allocation4 [shape = 'u8[8192]{0}', space=vmem, size = 0x2000, scoped, tag = 'output window, operand 1']
    #allocation5 [shape = 's32[2]{0}', space=sflag, size = 0x8, scoped, tag = 'scoped memory for tpu_custom_call.1']
    %15 = vsyncpa [#allocation3], 0
    %s16 = scalar_lea.sflag [#allocation3], 1
    %17 = vsyncpa %s16, 0
    %18 = vsyncpa [#allocation5], 0
    %s19 = scalar_lea.sflag [#allocation5], 1
    %20 = vsyncpa %s19, 0
    loop: start=0, step=1, limit=6
    $region2: #{tpu_custom_call.1} parent=1 // loop_pre_header
      _
    $region3: #{tpu_custom_call.1} parent=1 // loop_header
      %s22 = sphi 0, %s26
      %p23 = scmp.ge.s32.totalorder %s22, 6
      %s29 = sphi 0, %s41
      %s30 = sphi 0, %s37
      %s31 = sphi 0, %s29
      %s32 = sphi 0, %s30
      %s33 = sphi 0, %s31
      %s34 = sphi 0, %s32
      %s44 = sphi 0, %s46
      %s47 = sphi 0, %s44
      %s48 = sphi 0, %s47
      %s64 = sphi 0, %s48
      %s70 = sphi 0, %s72
      %s73 = sphi 0, %s70
      %s74 = sphi 0, %s73
      %s90 = sphi 0, %s74
      %s96 = sphi 0, %s98
      %s99 = sphi 0, %s96
      %s100 = sphi 0, %s99
      %s116 = sphi 0, %s100
      %s122 = sphi 0, %s124
      %s125 = sphi 0, %s122
      %s126 = sphi 0, %s125
      %s142 = sphi 0, %s126
      %s148 = sphi 0, %s150
      %s151 = sphi 0, %s148
      %s152 = sphi 0, %s151
      %s168 = sphi 0, %s152
      %s174 = sphi 0, %s176
      %s177 = sphi 0, %s174
      %s178 = sphi 0, %s177
      %s194 = sphi 0, %s178
      %s200 = sphi 0, %s202
      %s203 = sphi 0, %s200
      %s204 = sphi 0, %s203
      %s220 = sphi 0, %s204
      %s226 = sphi 0, %s228
      %s229 = sphi 0, %s226
      %s230 = sphi 0, %s229
      %s246 = sphi 0, %s230
      %s254 = sphi 0, %s256
      %s257 = sphi 0, %s254
      %s258 = sphi 0, %s257
      %s274 = sphi 0, %s258
      %s282 = sphi 0, %s284
      %s285 = sphi 0, %s282
      %s286 = sphi 0, %s285
      %s302 = sphi 0, %s286
    $region4: #{tpu_custom_call.1} parent=1 // loop_header_branch
      %25 = sbr.rel (%p23) target = $region8
    $region5: #{tpu_custom_call.1} parent=1 // loop_body
      %s27 = ssub.s32 %s22, 1
      %s28 = ssub.s32 %s22, 2
      %s35 = sadd.s32 1, %s30
      %p36 = scmp.ge.s32.totalorder %s35, 2
      %s37 = scalar_select %p36, 0, %s35
      %s38 = sadd.s32 1, %s29
      %s39 = scalar_select %p36, %s38, %s29
      %p40 = scmp.ge.s32.totalorder %s39, 2
      %s41 = scalar_select %p40, 0, %s39
      %s42 = ssub.s32 %s29, %s41
      %p43 = scmp.eq.s32.totalorder %s42, 0
      %s45 = sadd.s32 %s44, 1
      %s46 = scalar_select %p43, %s44, %s45
      %p49 = pneg %p43
      %p50 = scmp.eq.s32.totalorder %s22, 3
      %p51 = por %p49, %p50
      %p52 = scmp.ne.s32.totalorder %s44, %s47
      %p53 = scmp.eq.s32.totalorder %s22, 0
      %p54 = por %p52, %p53
      %p55 = scmp.ne.s32.totalorder %s44, %s47
      %p56 = scmp.eq.s32.totalorder %s27, 3
      %p57 = por %p55, %p56
      %p58 = scmp.ne.s32.totalorder %s47, %s48
      %p59 = scmp.eq.s32.totalorder %s27, 0
      %p60 = por %p58, %p59
      %p61 = scmp.ne.s32.totalorder %s47, %s48
      %p62 = scmp.eq.s32.totalorder %s28, 3
      %p63 = por %p61, %p62
      %p65 = scmp.ne.s32.totalorder %s48, %s64
      %p66 = scmp.eq.s32.totalorder %s28, 0
      %p67 = por %p65, %p66
      %s68 = ssub.s32 %s29, %s41
      %p69 = scmp.eq.s32.totalorder %s68, 0
      %s71 = sadd.s32 %s70, 1
      %s72 = scalar_select %p69, %s70, %s71
      %p75 = pneg %p69
      %p76 = scmp.eq.s32.totalorder %s22, 3
      %p77 = por %p75, %p76
      %p78 = scmp.ne.s32.totalorder %s70, %s73
      %p79 = scmp.eq.s32.totalorder %s22, 0
      %p80 = por %p78, %p79
      %p81 = scmp.ne.s32.totalorder %s70, %s73
      %p82 = scmp.eq.s32.totalorder %s27, 3
      %p83 = por %p81, %p82
      %p84 = scmp.ne.s32.totalorder %s73, %s74
      %p85 = scmp.eq.s32.totalorder %s27, 0
      %p86 = por %p84, %p85
      %p87 = scmp.ne.s32.totalorder %s73, %s74
      %p88 = scmp.eq.s32.totalorder %s28, 3
      %p89 = por %p87, %p88
      %p91 = scmp.ne.s32.totalorder %s74, %s90
      %p92 = scmp.eq.s32.totalorder %s28, 0
      %p93 = por %p91, %p92
      %s94 = ssub.s32 %s30, %s37
      %p95 = scmp.eq.s32.totalorder %s94, 0
      %s97 = sadd.s32 %s96, 1
      %s98 = scalar_select %p95, %s96, %s97
      %p101 = pneg %p95
      %p102 = scmp.eq.s32.totalorder %s22, 3
      %p103 = por %p101, %p102
      %p104 = scmp.ne.s32.totalorder %s96, %s99
      %p105 = scmp.eq.s32.totalorder %s22, 0
      %p106 = por %p104, %p105
      %p107 = scmp.ne.s32.totalorder %s96, %s99
      %p108 = scmp.eq.s32.totalorder %s27, 3
      %p109 = por %p107, %p108
      %p110 = scmp.ne.s32.totalorder %s99, %s100
      %p111 = scmp.eq.s32.totalorder %s27, 0
      %p112 = por %p110, %p111
      %p113 = scmp.ne.s32.totalorder %s99, %s100
      %p114 = scmp.eq.s32.totalorder %s28, 3
      %p115 = por %p113, %p114
      %p117 = scmp.ne.s32.totalorder %s100, %s116
      %p118 = scmp.eq.s32.totalorder %s28, 0
      %p119 = por %p117, %p118
      %s120 = ssub.s32 %s30, %s37
      %p121 = scmp.eq.s32.totalorder %s120, 0
      %s123 = sadd.s32 %s122, 1
      %s124 = scalar_select %p121, %s122, %s123
      %p127 = pneg %p121
      %p128 = scmp.eq.s32.totalorder %s22, 3
      %p129 = por %p127, %p128
      %p130 = scmp.ne.s32.totalorder %s122, %s125
      %p131 = scmp.eq.s32.totalorder %s22, 0
      %p132 = por %p130, %p131
      %p133 = scmp.ne.s32.totalorder %s122, %s125
      %p134 = scmp.eq.s32.totalorder %s27, 3
      %p135 = por %p133, %p134
      %p136 = scmp.ne.s32.totalorder %s125, %s126
      %p137 = scmp.eq.s32.totalorder %s27, 0
      %p138 = por %p136, %p137
      %p139 = scmp.ne.s32.totalorder %s125, %s126
      %p140 = scmp.eq.s32.totalorder %s28, 3
      %p141 = por %p139, %p140
      %p143 = scmp.ne.s32.totalorder %s126, %s142
      %p144 = scmp.eq.s32.totalorder %s28, 0
      %p145 = por %p143, %p144
      %s146 = ssub.s32 %s30, %s37
      %p147 = scmp.eq.s32.totalorder %s146, 0
      %s149 = sadd.s32 %s148, 1
      %s150 = scalar_select %p147, %s148, %s149
      %p153 = pneg %p147
      %p154 = scmp.eq.s32.totalorder %s22, 3
      %p155 = por %p153, %p154
      %p156 = scmp.ne.s32.totalorder %s148, %s151
      %p157 = scmp.eq.s32.totalorder %s22, 0
      %p158 = por %p156, %p157
      %p159 = scmp.ne.s32.totalorder %s148, %s151
      %p160 = scmp.eq.s32.totalorder %s27, 3
      %p161 = por %p159, %p160
      %p162 = scmp.ne.s32.totalorder %s151, %s152
      %p163 = scmp.eq.s32.totalorder %s27, 0
      %p164 = por %p162, %p163
      %p165 = scmp.ne.s32.totalorder %s151, %s152
      %p166 = scmp.eq.s32.totalorder %s28, 3
      %p167 = por %p165, %p166
      %p169 = scmp.ne.s32.totalorder %s152, %s168
      %p170 = scmp.eq.s32.totalorder %s28, 0
      %p171 = por %p169, %p170
      %s172 = ssub.s32 %s30, %s37
      %p173 = scmp.eq.s32.totalorder %s172, 0
      %s175 = sadd.s32 %s174, 1
      %s176 = scalar_select %p173, %s174, %s175
      %p179 = pneg %p173
      %p180 = scmp.eq.s32.totalorder %s22, 3
      %p181 = por %p179, %p180
      %p182 = scmp.ne.s32.totalorder %s174, %s177
      %p183 = scmp.eq.s32.totalorder %s22, 0
      %p184 = por %p182, %p183
      %p185 = scmp.ne.s32.totalorder %s174, %s177
      %p186 = scmp.eq.s32.totalorder %s27, 3
      %p187 = por %p185, %p186
      %p188 = scmp.ne.s32.totalorder %s177, %s178
      %p189 = scmp.eq.s32.totalorder %s27, 0
      %p190 = por %p188, %p189
      %p191 = scmp.ne.s32.totalorder %s177, %s178
      %p192 = scmp.eq.s32.totalorder %s28, 3
      %p193 = por %p191, %p192
      %p195 = scmp.ne.s32.totalorder %s178, %s194
      %p196 = scmp.eq.s32.totalorder %s28, 0
      %p197 = por %p195, %p196
      %s198 = ssub.s32 %s30, %s37
      %p199 = scmp.eq.s32.totalorder %s198, 0
      %s201 = sadd.s32 %s200, 1
      %s202 = scalar_select %p199, %s200, %s201
      %p205 = pneg %p199
      %p206 = scmp.eq.s32.totalorder %s22, 3
      %p207 = por %p205, %p206
      %p208 = scmp.ne.s32.totalorder %s200, %s203
      %p209 = scmp.eq.s32.totalorder %s22, 0
      %p210 = por %p208, %p209
      %p211 = scmp.ne.s32.totalorder %s200, %s203
      %p212 = scmp.eq.s32.totalorder %s27, 3
      %p213 = por %p211, %p212
      %p214 = scmp.ne.s32.totalorder %s203, %s204
      %p215 = scmp.eq.s32.totalorder %s27, 0
      %p216 = por %p214, %p215
      %p217 = scmp.ne.s32.totalorder %s203, %s204
      %p218 = scmp.eq.s32.totalorder %s28, 3
      %p219 = por %p217, %p218
      %p221 = scmp.ne.s32.totalorder %s204, %s220
      %p222 = scmp.eq.s32.totalorder %s28, 0
      %p223 = por %p221, %p222
      %s224 = ssub.s32 %s30, %s37
      %p225 = scmp.eq.s32.totalorder %s224, 0
      %s227 = sadd.s32 %s226, 1
      %s228 = scalar_select %p225, %s226, %s227
      %p231 = pneg %p225
      %p232 = scmp.eq.s32.totalorder %s22, 3
      %p233 = por %p231, %p232
      %p234 = scmp.ne.s32.totalorder %s226, %s229
      %p235 = scmp.eq.s32.totalorder %s22, 0
      %p236 = por %p234, %p235
      %p237 = scmp.ne.s32.totalorder %s226, %s229
      %p238 = scmp.eq.s32.totalorder %s27, 3
      %p239 = por %p237, %p238
      %p240 = scmp.ne.s32.totalorder %s229, %s230
      %p241 = scmp.eq.s32.totalorder %s27, 0
      %p242 = por %p240, %p241
      %p243 = scmp.ne.s32.totalorder %s229, %s230
      %p244 = scmp.eq.s32.totalorder %s28, 3
      %p245 = por %p243, %p244
      %p247 = scmp.ne.s32.totalorder %s230, %s246
      %p248 = scmp.eq.s32.totalorder %s28, 0
      %p249 = por %p247, %p248
      %s250 = ssub.s32 %s29, %s41
      %s251 = ssub.s32 %s30, %s37
      %s252 = sor.u32 %s250, %s251
      %p253 = scmp.eq.s32.totalorder %s252, 0
      %s255 = sadd.s32 %s254, 1
      %s256 = scalar_select %p253, %s254, %s255
      %p259 = pneg %p253
      %p260 = scmp.eq.s32.totalorder %s22, 3
      %p261 = por %p259, %p260
      %p262 = scmp.ne.s32.totalorder %s254, %s257
      %p263 = scmp.eq.s32.totalorder %s22, 0
      %p264 = por %p262, %p263
      %p265 = scmp.ne.s32.totalorder %s254, %s257
      %p266 = scmp.eq.s32.totalorder %s27, 3
      %p267 = por %p265, %p266
      %p268 = scmp.ne.s32.totalorder %s257, %s258
      %p269 = scmp.eq.s32.totalorder %s27, 0
      %p270 = por %p268, %p269
      %p271 = scmp.ne.s32.totalorder %s257, %s258
      %p272 = scmp.eq.s32.totalorder %s28, 3
      %p273 = por %p271, %p272
      %p275 = scmp.ne.s32.totalorder %s258, %s274
      %p276 = scmp.eq.s32.totalorder %s28, 0
      %p277 = por %p275, %p276
      %s278 = ssub.s32 %s29, %s41
      %s279 = ssub.s32 %s30, %s37
      %s280 = sor.u32 %s278, %s279
      %p281 = scmp.eq.s32.totalorder %s280, 0
      %s283 = sadd.s32 %s282, 1
      %s284 = scalar_select %p281, %s282, %s283
      %p287 = pneg %p281
      %p288 = scmp.eq.s32.totalorder %s22, 3
      %p289 = por %p287, %p288
      %p290 = scmp.ne.s32.totalorder %s282, %s285
      %p291 = scmp.eq.s32.totalorder %s22, 0
      %p292 = por %p290, %p291
      %p293 = scmp.ne.s32.totalorder %s282, %s285
      %p294 = scmp.eq.s32.totalorder %s27, 3
      %p295 = por %p293, %p294
      %p296 = scmp.ne.s32.totalorder %s285, %s286
      %p297 = scmp.eq.s32.totalorder %s27, 0
      %p298 = por %p296, %p297
      %p299 = scmp.ne.s32.totalorder %s285, %s286
      %p300 = scmp.eq.s32.totalorder %s28, 3
      %p301 = por %p299, %p300
      %p303 = scmp.ne.s32.totalorder %s286, %s302
      %p304 = scmp.eq.s32.totalorder %s28, 0
      %p305 = por %p303, %p304
      %p306 = scmp.le.s32.totalorder 1, %s22
      %p307 = scmp.lt.s32.totalorder %s22, 5
      %p308 = pnand %p306, %p307
      %p309 = pneg %p308
      // Predicated region
      $region9: #{tpu_custom_call.1} parent=5 // pred_check
        _
      $region10: #{tpu_custom_call.1} parent=5 // pred_check_branch
        %311 = sbr.rel (%p308) target = $region12
      $region11: #{tpu_custom_call.1} parent=5 // pred_region
        %s312 = ssub.s32 %s22, 1
      $region12: #{tpu_custom_call.1} parent=5 // pred_fallthru
        _
      %p313 = scmp.lt.s32.totalorder %s22, 4
      // Predicated region
      $region13: #{tpu_custom_call.1} parent=5 // pred_check
        %p314 = pneg %p313
      $region14: #{tpu_custom_call.1} parent=5 // pred_check_branch
        %316 = sbr.rel (%p314) target = $region16
      $region15: #{tpu_custom_call.1} parent=5 // pred_region
        // Predicated region
        $region17: #{tpu_custom_call.1} parent=15 // pred_check
          %p317 = pneg %p54
        $region18: #{tpu_custom_call.1} parent=15 // pred_check_branch
          %319 = sbr.rel (%p317) target = $region20
        $region19: #{tpu_custom_call.1} parent=15 // pred_region
          %p320 = scmp.lt.s32.totalorder %s29, 1
          %s321 = scalar_select %p320, %s29, 1
          %s322 = smul.addr %s321, 8
          %s323 = scalar_lea.vmem %s0, %s322
        $region20: #{tpu_custom_call.1} parent=15 // pred_fallthru
          _
        // Predicated region
        $region21: #{tpu_custom_call.1} parent=15 // pred_check
          %p324 = pneg %p80
        $region22: #{tpu_custom_call.1} parent=15 // pred_check_branch
          %326 = sbr.rel (%p324) target = $region24
        $region23: #{tpu_custom_call.1} parent=15 // pred_region
          %p327 = scmp.lt.s32.totalorder %s29, 1
          %s328 = scalar_select %p327, %s29, 1
          %s329 = smul.addr %s328, 8
          %s330 = scalar_lea.vmem %s1, %s329
        $region24: #{tpu_custom_call.1} parent=15 // pred_fallthru
          _
        // Predicated region
        $region25: #{tpu_custom_call.1} parent=15 // pred_check
          %p331 = pneg %p106
        $region26: #{tpu_custom_call.1} parent=15 // pred_check_branch
          %333 = sbr.rel (%p331) target = $region28
        $region27: #{tpu_custom_call.1} parent=15 // pred_region
          %p334 = scmp.lt.s32.totalorder %s30, 1
          %s335 = scalar_select %p334, %s30, 1
          %s336 = smul.addr %s335, 4
          %s337 = smul.addr %s336, 4
          %s338 = scalar_lea.vmem %s2, %s337
        $region28: #{tpu_custom_call.1} parent=15 // pred_fallthru
          _
        // Predicated region
        $region29: #{tpu_custom_call.1} parent=15 // pred_check
          %p339 = pneg %p132
        $region30: #{tpu_custom_call.1} parent=15 // pred_check_branch
          %341 = sbr.rel (%p339) target = $region32
        $region31: #{tpu_custom_call.1} parent=15 // pred_region
          %p342 = scmp.lt.s32.totalorder %s30, 1
          %s343 = scalar_select %p342, %s30, 1
          %s344 = scalar_lea.vmem %s3, %s343
        $region32: #{tpu_custom_call.1} parent=15 // pred_fallthru
          _
        // Predicated region
        $region33: #{tpu_custom_call.1} parent=15 // pred_check
          %p345 = pneg %p158
        $region34: #{tpu_custom_call.1} parent=15 // pred_check_branch
          %347 = sbr.rel (%p345) target = $region36
        $region35: #{tpu_custom_call.1} parent=15 // pred_region
          %p348 = scmp.lt.s32.totalorder %s30, 1
          %s349 = scalar_select %p348, %s30, 1
          %s350 = smul.addr %s349, 4
          %s351 = smul.addr %s350, 4
          %s352 = scalar_lea.vmem %s4, %s351
        $region36: #{tpu_custom_call.1} parent=15 // pred_fallthru
          _
        // Predicated region
        $region37: #{tpu_custom_call.1} parent=15 // pred_check
          %p353 = pneg %p184
        $region38: #{tpu_custom_call.1} parent=15 // pred_check_branch
          %355 = sbr.rel (%p353) target = $region40
        $region39: #{tpu_custom_call.1} parent=15 // pred_region
          %p356 = scmp.lt.s32.totalorder %s30, 1
          %s357 = scalar_select %p356, %s30, 1
          %s358 = scalar_lea.vmem %s5, %s357
        $region40: #{tpu_custom_call.1} parent=15 // pred_fallthru
          _
        // Predicated region
        $region41: #{tpu_custom_call.1} parent=15 // pred_check
          %p359 = pneg %p210
        $region42: #{tpu_custom_call.1} parent=15 // pred_check_branch
          %361 = sbr.rel (%p359) target = $region44
        $region43: #{tpu_custom_call.1} parent=15 // pred_region
          %p362 = scmp.lt.s32.totalorder %s30, 1
          %s363 = scalar_select %p362, %s30, 1
          %s364 = smul.addr %s363, 4
          %s365 = smul.addr %s364, 4
          %s366 = scalar_lea.vmem %s6, %s365
        $region44: #{tpu_custom_call.1} parent=15 // pred_fallthru
          _
        // Predicated region
        $region45: #{tpu_custom_call.1} parent=15 // pred_check
          %p367 = pneg %p236
        $region46: #{tpu_custom_call.1} parent=15 // pred_check_branch
          %369 = sbr.rel (%p367) target = $region48
        $region47: #{tpu_custom_call.1} parent=15 // pred_region
          %p370 = scmp.lt.s32.totalorder %s30, 1
          %s371 = scalar_select %p370, %s30, 1
          %s372 = scalar_lea.vmem %s7, %s371
        $region48: #{tpu_custom_call.1} parent=15 // pred_fallthru
          _
      $region16: #{tpu_custom_call.1} parent=5 // pred_fallthru
        _
      %p373 = scmp.le.s32.totalorder 1, %s22
      %p374 = scmp.lt.s32.totalorder %s22, 5
      %p375 = pnand %p373, %p374
      %p376 = pneg %p375
      // Predicated region
      $region49: #{tpu_custom_call.1} parent=5 // pred_check
        _
      $region50: #{tpu_custom_call.1} parent=5 // pred_check_branch
        %378 = sbr.rel (%p375) target = $region52
      $region51: #{tpu_custom_call.1} parent=5 // pred_region
        %s379 = ssub.s32 %s22, 1
        %p380 = scmp.lt.s32.totalorder %s31, 1
        %s381 = scalar_select %p380, %s31, 1
        %s382 = smul.addr %s381, 8
        %s383 = scalar_lea.vmem %s0, %s382
        %p384 = pneg %p60
        %p385 = pneg %p57
        %p386 = scmp.lt.s32.totalorder %s31, 1
        %s387 = scalar_select %p386, %s31, 1
        %s388 = smul.addr %s387, 8
        %s389 = scalar_lea.vmem %s1, %s388
        %p390 = pneg %p86
        %p391 = pneg %p83
        %p392 = scmp.lt.s32.totalorder %s32, 1
        %s393 = scalar_select %p392, %s32, 1
        %s394 = smul.addr %s393, 4
        %s395 = smul.addr %s394, 4
        %s396 = scalar_lea.vmem %s2, %s395
        %p397 = pneg %p112
        %p398 = pneg %p109
        %p399 = scmp.lt.s32.totalorder %s32, 1
        %s400 = scalar_select %p399, %s32, 1
        %s401 = scalar_lea.vmem %s3, %s400
        %p402 = pneg %p138
        %p403 = pneg %p135
        %p404 = scmp.lt.s32.totalorder %s32, 1
        %s405 = scalar_select %p404, %s32, 1
        %s406 = smul.addr %s405, 4
        %s407 = smul.addr %s406, 4
        %s408 = scalar_lea.vmem %s4, %s407
        %p409 = pneg %p164
        %p410 = pneg %p161
        %p411 = scmp.lt.s32.totalorder %s32, 1
        %s412 = scalar_select %p411, %s32, 1
        %s413 = scalar_lea.vmem %s5, %s412
        %p414 = pneg %p190
        %p415 = pneg %p187
        %p416 = scmp.lt.s32.totalorder %s32, 1
        %s417 = scalar_select %p416, %s32, 1
        %s418 = smul.addr %s417, 4
        %s419 = smul.addr %s418, 4
        %s420 = scalar_lea.vmem %s6, %s419
        %p421 = pneg %p216
        %p422 = pneg %p213
        %p423 = scmp.lt.s32.totalorder %s32, 1
        %s424 = scalar_select %p423, %s32, 1
        %s425 = scalar_lea.vmem %s7, %s424
        %p426 = pneg %p242
        %p427 = pneg %p239
        %p428 = pneg %p270
        %p429 = pneg %p267
        %s430 = sand.u32 %s257, 1
        %s431 = scalar_lea.sflag [#allocation3], %s430
        %s432 = sand.u32 %s257, 1
        %s433 = smul.addr %s432, 8
        %s434 = scalar_lea.vmem [#allocation2], %s433
        %p435 = pneg %p298
        %p436 = pneg %p295
        %s437 = sand.u32 %s285, 1
        %s438 = scalar_lea.sflag [#allocation5], %s437
        %s439 = sand.u32 %s285, 1
        %s440 = smul.addr %s439, 8
        %s441 = scalar_lea.vmem [#allocation4], %s440
        %p442 = scmp.lt.s32.totalorder %s31, 1
        %s443 = scalar_select %p442, %s31, 1
        %s444 = smul.addr %s443, 8
        %s445 = scalar_lea.vmem %s0, %s444
        %p446 = scmp.lt.s32.totalorder %s31, 1
        %s447 = scalar_select %p446, %s31, 1
        %s448 = smul.addr %s447, 8
        %s449 = scalar_lea.vmem %s1, %s448
        %p450 = scmp.lt.s32.totalorder %s32, 1
        %s451 = scalar_select %p450, %s32, 1
        %s452 = smul.addr %s451, 4
        %s453 = smul.addr %s452, 4
        %s454 = scalar_lea.vmem %s2, %s453
        %p455 = scmp.lt.s32.totalorder %s32, 1
        %s456 = scalar_select %p455, %s32, 1
        %s457 = scalar_lea.vmem %s3, %s456
        %p458 = scmp.lt.s32.totalorder %s32, 1
        %s459 = scalar_select %p458, %s32, 1
        %s460 = smul.addr %s459, 4
        %s461 = smul.addr %s460, 4
        %s462 = scalar_lea.vmem %s4, %s461
        %p463 = scmp.lt.s32.totalorder %s32, 1
        %s464 = scalar_select %p463, %s32, 1
        %s465 = scalar_lea.vmem %s5, %s464
        %p466 = scmp.lt.s32.totalorder %s32, 1
        %s467 = scalar_select %p466, %s32, 1
        %s468 = smul.addr %s467, 4
        %s469 = smul.addr %s468, 4
        %s470 = scalar_lea.vmem %s6, %s469
        %p471 = scmp.lt.s32.totalorder %s32, 1
        %s472 = scalar_select %p471, %s32, 1
        %s473 = scalar_lea.vmem %s7, %s472
        %v475 = vld [vmem:[%s445] sm:$0xff]
        %v476 = vpack.c.bf16 %v475, %v475
        %v477 = vld [vmem:[%s454] sm:$0xf]
        %v478 = vld [vmem:[%s454 + $0x4] sm:$0xf]
        %v479 = vld [vmem:[%s454 + $0x8] sm:$0xf]
        %v480 = vld [vmem:[%s454 + $0xc] sm:$0xf]
        %v481 = vld [vmem:[%s457] sm:$0x1]
        %v483 = vperm.slane %v481, 0
        %v489 = vunpack.c.l.b16 %v477
        %v490 = vunpack.c.l.b16 %v478
        %v491 = vunpack.c.l.b16 %v479
        %v492 = vunpack.c.l.b16 %v480
        %v493 = vpack.c.b16 %v490, %v489
        %v494 = vpack.c.b16 %v492, %v491
        %vm497 = vcmask 261120
        %v499 = vsel %vm497, %v476, 0
        %501 = vmatpush.bf16.msra.mxu0 0
        %502 = vmatpush.bf16.msra.mxu0 0
        %503 = vmatpush.bf16.msra.mxu0 0
        %504 = vmatpush.bf16.msra.mxu0 0
        %505 = vmatpush.bf16.msra.mxu0 0
        %506 = vmatpush.bf16.msra.mxu0 0
        %507 = vmatpush.bf16.msra.mxu0 %v494
        %508 = vmatpush.bf16.msra.mxu0 %v493
        %509 = vmatmul.bf16.gmra.mxu0 %v499
        %v510 = vpop.f32.mrf.mxu0
        %v511 = vadd.f32 %v483, %v510
        %v512 = vpop.f32.mrf.mxu0
        %513 = vdwg.mxu0
        %v514 = vld [vmem:[%s462] sm:$0xf]
        %v515 = vld [vmem:[%s462 + $0x4] sm:$0xf]
        %v516 = vld [vmem:[%s462 + $0x8] sm:$0xf]
        %v517 = vld [vmem:[%s462 + $0xc] sm:$0xf]
        %v518 = vld [vmem:[%s465] sm:$0x1]
        %v520 = vperm.slane %v518, 0
        %v526 = vunpack.c.l.b16 %v514
        %v527 = vunpack.c.l.b16 %v515
        %v528 = vunpack.c.l.b16 %v516
        %v529 = vunpack.c.l.b16 %v517
        %v530 = vpack.c.b16 %v527, %v526
        %v531 = vpack.c.b16 %v529, %v528
        %534 = vmatpush.bf16.msra.mxu0 0
        %535 = vmatpush.bf16.msra.mxu0 0
        %536 = vmatpush.bf16.msra.mxu0 0
        %537 = vmatpush.bf16.msra.mxu0 0
        %538 = vmatpush.bf16.msra.mxu0 0
        %539 = vmatpush.bf16.msra.mxu0 0
        %540 = vmatpush.bf16.msra.mxu0 %v531
        %541 = vmatpush.bf16.msra.mxu0 %v530
        %542 = vmatmul.bf16.gmra.mxu0 %v499
        %v543 = vpop.f32.mrf.mxu0
        %v544 = vadd.f32 %v520, %v543
        %v545 = vpop.f32.mrf.mxu0
        %546 = vdwg.mxu0
        %v547 = vld [vmem:[%s470] sm:$0xf]
        %v548 = vld [vmem:[%s470 + $0x4] sm:$0xf]
        %v549 = vld [vmem:[%s470 + $0x8] sm:$0xf]
        %v550 = vld [vmem:[%s470 + $0xc] sm:$0xf]
        %v551 = vld [vmem:[%s473] sm:$0x1]
        %v553 = vperm.slane %v551, 0
        %v559 = vunpack.c.l.b16 %v547
        %v560 = vunpack.c.l.b16 %v548
        %v561 = vunpack.c.l.b16 %v549
        %v562 = vunpack.c.l.b16 %v550
        %v563 = vpack.c.b16 %v560, %v559
        %v564 = vpack.c.b16 %v562, %v561
        %567 = vmatpush.bf16.msra.mxu0 0
        %568 = vmatpush.bf16.msra.mxu0 0
        %569 = vmatpush.bf16.msra.mxu0 0
        %570 = vmatpush.bf16.msra.mxu0 0
        %571 = vmatpush.bf16.msra.mxu0 0
        %572 = vmatpush.bf16.msra.mxu0 0
        %573 = vmatpush.bf16.msra.mxu0 %v564
        %574 = vmatpush.bf16.msra.mxu0 %v563
        %575 = vmatmul.bf16.gmra.mxu0 %v499
        %v576 = vpop.f32.mrf.mxu0
        %v577 = vadd.f32 %v553, %v576
        %v578 = vpop.f32.mrf.mxu0
        %579 = vdwg.mxu0
        %v580 = vpack.c.bf16 %v511, %v511
        %v581 = vpack.c.bf16 %v544, %v544
        %v582 = vld [vmem:[%s449] sm:$0xff]
        %vm583 = vcmask 130048
        %v585 = vsel %vm583, %v580, 0
        %v588 = vsel %vm583, %v581, 0
        %590 = vmatpush.bf16.xpose.msra.mxu0 0
        %591 = vmatpush.bf16.xpose.msra.mxu0 0
        %592 = vmatpush.bf16.xpose.msra.mxu0 0
        %593 = vmatpush.bf16.xpose.msra.mxu0 0
        %594 = vmatpush.bf16.xpose.msra.mxu0 0
        %595 = vmatpush.bf16.xpose.msra.mxu0 0
        %596 = vmatpush.bf16.xpose.msra.mxu0 0
        %597 = vmatpush.bf16.xpose.msra.mxu0 %v588
        %598 = vmatmul.bf16.gmra.mxu0 %v585
        %v599 = vpop.f32.mrf.mxu0
        %v600 = vadd.f32 %v582, %v599
        %v601 = vpop.f32.mrf.mxu0
        %602 = vdwg.mxu0
        %vm603 = vcmask 64512
        %v604 = vsel %vm603, %v600, -inf
        %605 = vmax.xlane.f32.xlu0 %v604
        %v606 = vpop.xlane.xlu0 %605
        %v607 = vsub.f32 %v600, %v606
        %v608 = vmul.f32 %v607, 1.442695
        %v609 = vpow.pop %v608
        %v610 = vsel %vm603, %v609, 0.0
        %611 = vadd.xlane.f32.xlu0 %v610
        %v612 = vpop.xlane.xlu0 %611
        %v613 = vrcp.pop %v612
        %v614 = vmul.f32 %v609, %v613
        %v615 = vpack.c.bf16 %v614, %v614
        %v616 = vpack.c.bf16 %v577, %v577
        %v618 = vsel %vm603, %v615, 0
        %vm620 = vcmask 1043456
        %v622 = vsel %vm620, %v616, 0
        %624 = vmatpush.bf16.msra.mxu0 0
        %625 = vmatpush.bf16.msra.mxu0 0
        %626 = vmatpush.bf16.msra.mxu0 0
        %627 = vmatpush.bf16.msra.mxu0 0
        %628 = vmatpush.bf16.msra.mxu0 0
        %629 = vmatpush.bf16.msra.mxu0 0
        %630 = vmatpush.bf16.msra.mxu0 0
        %631 = vmatpush.bf16.msra.mxu0 %v622
        %632 = vmatmul.bf16.gmra.mxu0 %v618
        %v633 = vpop.f32.mrf.mxu0
        %v634 = vadd.f32 0.0, %v633
        %v635 = vpop.f32.mrf.mxu0
        %636 = vdwg.mxu0
        %637 = vst.msk [vmem:[%s434] sm:$0xff] %vm583, %v634
        %638 = vst.msk [vmem:[%s441] sm:$0xff] %vm603, %v614
        %s639 = sand.u32 %s257, 1
        %s640 = scalar_lea.sflag [#allocation3], %s639
        %s641 = sand.u32 %s257, 1
        %s642 = smul.addr %s641, 8
        %s643 = scalar_lea.vmem [#allocation2], %s642
        %s644 = sand.u32 %s285, 1
        %s645 = scalar_lea.sflag [#allocation5], %s644
        %s646 = sand.u32 %s285, 1
        %s647 = smul.addr %s646, 8
        %s648 = scalar_lea.vmem [#allocation4], %s647
        // Predicated region
        $region53: #{tpu_custom_call.1} parent=51 // pred_check
          %p649 = pneg %p267
        $region54: #{tpu_custom_call.1} parent=51 // pred_check_branch
          %651 = sbr.rel (%p649) target = $region56
        $region55: #{tpu_custom_call.1} parent=51 // pred_region
          %653 = vsyncadd %s640, 0
          %s654 = smul.addr %s31, 2
          %s655 = sadd.s32 %s32, %s654
          %s656 = smul.addr %s655, 8
          %s657 = scalar_lea.hbm %s8, %s656
          %s659 = sshll.u32 %s643, 4
          %s660 = int_to_ptr.vmem [resolvable:$true] %s659
          %s661 = sshll.u32 %s657, 4
          %s662 = int_to_ptr.hbm [resolvable:$true] %s661
          %664 = dma.vmem_to_hbm [thread:$0]  %s660, 128, %s662, %s640
        $region56: #{tpu_custom_call.1} parent=51 // pred_fallthru
          _
        // Predicated region
        $region57: #{tpu_custom_call.1} parent=51 // pred_check
          %p665 = pneg %p295
        $region58: #{tpu_custom_call.1} parent=51 // pred_check_branch
          %667 = sbr.rel (%p665) target = $region60
        $region59: #{tpu_custom_call.1} parent=51 // pred_region
          %669 = vsyncadd %s645, 0
          %s670 = smul.addr %s31, 2
          %s671 = sadd.s32 %s32, %s670
          %s672 = smul.addr %s671, 8
          %s673 = scalar_lea.hbm %s9, %s672
          %s675 = sshll.u32 %s648, 4
          %s676 = int_to_ptr.vmem [resolvable:$true] %s675
          %s677 = sshll.u32 %s673, 4
          %s678 = int_to_ptr.hbm [resolvable:$true] %s677
          %680 = dma.vmem_to_hbm [thread:$0]  %s676, 128, %s678, %s645
        $region60: #{tpu_custom_call.1} parent=51 // pred_fallthru
          _
      $region52: #{tpu_custom_call.1} parent=5 // pred_fallthru
        _
      %p681 = scmp.le.s32.totalorder 2, %s22
      // Predicated region
      $region61: #{tpu_custom_call.1} parent=5 // pred_check
        %p682 = pneg %p681
      $region62: #{tpu_custom_call.1} parent=5 // pred_check_branch
        %684 = sbr.rel (%p682) target = $region64
      $region63: #{tpu_custom_call.1} parent=5 // pred_region
        %s685 = ssub.s32 %s22, 2
        // Predicated region
        $region65: #{tpu_custom_call.1} parent=63 // pred_check
          %p686 = pneg %p273
        $region66: #{tpu_custom_call.1} parent=63 // pred_check_branch
          %688 = sbr.rel (%p686) target = $region68
        $region67: #{tpu_custom_call.1} parent=63 // pred_region
          %s689 = sand.u32 %s258, 1
          %s690 = scalar_lea.sflag [#allocation3], %s689
          %s691 = sand.u32 %s258, 1
          %s692 = smul.addr %s691, 8
          %s693 = scalar_lea.vmem [#allocation2], %s692
          %695 = dma.done %s690, 128
        $region68: #{tpu_custom_call.1} parent=63 // pred_fallthru
          _
        // Predicated region
        $region69: #{tpu_custom_call.1} parent=63 // pred_check
          %p696 = pneg %p301
        $region70: #{tpu_custom_call.1} parent=63 // pred_check_branch
          %698 = sbr.rel (%p696) target = $region72
        $region71: #{tpu_custom_call.1} parent=63 // pred_region
          %s699 = sand.u32 %s286, 1
          %s700 = scalar_lea.sflag [#allocation5], %s699
          %s701 = sand.u32 %s286, 1
          %s702 = smul.addr %s701, 8
          %s703 = scalar_lea.vmem [#allocation4], %s702
          %705 = dma.done %s700, 128
        $region72: #{tpu_custom_call.1} parent=63 // pred_fallthru
          _
      $region64: #{tpu_custom_call.1} parent=5 // pred_fallthru
        _
    $region6: #{tpu_custom_call.1} parent=1 // loop_footer
      %s26 = sadd.s32 1, %s22
    $region7: #{tpu_custom_call.1} parent=1 // loop_footer_branch
      %21 = sbr.rel target = $region3
    $region8: #{tpu_custom_call.1} parent=1 // loop_exit
      _
    %706 = vsyncpa [#allocation3], 1
    %s707 = scalar_lea.sflag [#allocation3], 1
    %708 = vsyncpa %s707, 1
    %709 = vsyncpa [#allocation5], 1
    %s710 = scalar_lea.sflag [#allocation5], 1
    %711 = vsyncpa %s710, 1

</llo_original>
